<compile_context>
chip_gen: v5e
topology: v5e:2x2
jax: 0.10.0
libtpu: 0.0.40
codegen_flags: <defaults>
</compile_context>

<pallas_src>
import functools

import jax
import jax.numpy as jnp
from jax.experimental import pallas as pl
from jax.experimental.pallas import tpu as pltpu


def mlp_kernel(x_ref, w1_ref, b1_ref, w2_ref, b2_ref, w3_ref, b3_ref, o_ref,
               *, compute_dtype):
    """One batch tile of the fused MLP.

    Three MXU matmuls with f32 accumulation; bias adds and ReLUs on the VPU.
    Weights/biases are the same resident VMEM blocks for every grid step.
    """
    x = x_ref[...].astype(compute_dtype)

    h1 = jnp.dot(x, w1_ref[...].astype(compute_dtype),
                 preferred_element_type=jnp.float32)
    h1 = jnp.maximum(h1 + b1_ref[...], 0.0)

    h2 = jnp.dot(h1.astype(compute_dtype), w2_ref[...].astype(compute_dtype),
                 preferred_element_type=jnp.float32)
    h2 = jnp.maximum(h2 + b2_ref[...], 0.0)

    out = jnp.dot(h2.astype(compute_dtype), w3_ref[...].astype(compute_dtype),
                  preferred_element_type=jnp.float32)
    out = out + b3_ref[...]

    o_ref[...] = out.astype(o_ref.dtype)


def _round_up(v, m):
    return ((v + m - 1) // m) * m


def _jnp_forward(x, params):
    """Pure-JAX reference / small-batch fast path (same math as the kernel)."""
    w1, b1, w2, b2, w3, b3 = params
    h1 = jnp.maximum(x @ w1 + b1, 0.0)
    h2 = jnp.maximum(h1 @ w2 + b2, 0.0)
    return h2 @ w3 + b3


def _choose_batch_tile(batch8, batch_tile):
    """Pick a batch tile (multiple of 8, <= batch_tile).

    For multi-tile grids, choose the largest tile that gives an EVEN grid
    length (v7x megacore load balance) with minimal padding waste.  On
    single-TC chips (v5e/v6e) this is still a good, low-waste choice.
    """
    if batch8 <= batch_tile:
        return batch8                       # single tile, no batch padding
    n = 2
    while True:
        tb = _round_up(pl.cdiv(batch8, n), 8)
        if tb <= batch_tile:
            return tb
        n += 2


def network_forward(x, params, *, batch_tile=2048, min_kernel_batch=256,
                    use_bf16_dots=False):
    """Pallas forward pass for the MultiStep DQN Network.

    x:      (batch, state_dim) f32
    params: (w1, b1, w2, b2, w3, b3) with weights shaped (in, out).
    Returns (batch, action_dim).
    """
    w1, b1, w2, b2, w3, b3 = params
    batch, state_dim = x.shape
    hidden = w1.shape[1]
    action_dim = w3.shape[1]

    # Small-batch fast path: pallas_call fixed cost (custom-call dispatch +
    # per-step overhead + padding) exceeds XLA-fused jnp at per-env-step sizes.
    if batch < min_kernel_batch:
        return _jnp_forward(x, params)

    # Biases as (1, N) rows: resident VMEM blocks, implicit broadcast in '+'.
    b1 = b1.reshape(1, -1)
    b2 = b2.reshape(1, -1)
    b3 = b3.reshape(1, -1)

    # --- batch tiling: multiple of 8 (f32 sublane), even grid length when
    # multi-tile, minimal padding waste. ---
    batch8 = _round_up(batch, 8)
    tb = _choose_batch_tile(batch8, _round_up(max(batch_tile, 8), 8))
    padded_batch = _round_up(batch8, tb)
    if padded_batch != batch:
        x = jnp.pad(x, ((0, padded_batch - batch), (0, 0)))

    grid = (padded_batch // tb,)
    compute_dtype = jnp.bfloat16 if use_bf16_dots else x.dtype

    # VMEM budget ~ 2x the live tile set (double-buffered x/out tiles, h1/h2
    # f32 temporaries, double-buffered weights/biases), clamped to a range
    # that is safe on every generation (v7x physical VMEM is 64 MiB).
    f32 = 4
    live_bytes = f32 * (
        2 * tb * state_dim                      # x tile, double-buffered
        + 2 * tb * action_dim                   # out tile, double-buffered
        + 2 * tb * hidden                       # h1 / h2 f32 temporaries
        + 2 * (state_dim * hidden + hidden      # w1, b1
               + hidden * hidden + hidden       # w2, b2
               + hidden * action_dim + action_dim)  # w3, b3
    )
    vmem_limit = int(min(48 * 2**20, max(2 * live_bytes, 16 * 2**20)))

    itemsize = jnp.dtype(x.dtype).itemsize
    flops = 2 * padded_batch * (
        state_dim * hidden + hidden * hidden + hidden * action_dim)
    bytes_accessed = itemsize * (
        padded_batch * state_dim                # x
        + state_dim * hidden + hidden           # w1, b1
        + hidden * hidden + hidden              # w2, b2
        + hidden * action_dim + action_dim      # w3, b3
        + padded_batch * action_dim             # output (unpadded lanes)
    )

    kernel = functools.partial(mlp_kernel, compute_dtype=compute_dtype)

    out = pl.pallas_call(
        kernel,
        out_shape=jax.ShapeDtypeStruct((padded_batch, action_dim), x.dtype),
        grid=grid,
        in_specs=[
            pl.BlockSpec((tb, state_dim), lambda i: (i, 0)),       # x tile
            pl.BlockSpec((state_dim, hidden), lambda i: (0, 0)),   # w1 (resident)
            pl.BlockSpec((1, hidden), lambda i: (0, 0)),           # b1 (resident)
            pl.BlockSpec((hidden, hidden), lambda i: (0, 0)),      # w2 (resident)
            pl.BlockSpec((1, hidden), lambda i: (0, 0)),           # b2 (resident)
            pl.BlockSpec((hidden, action_dim), lambda i: (0, 0)),  # w3 (resident)
            pl.BlockSpec((1, action_dim), lambda i: (0, 0)),       # b3 (resident)
        ],
        out_specs=pl.BlockSpec((tb, action_dim), lambda i: (i, 0)),
        compiler_params=pltpu.CompilerParams(
            dimension_semantics=("parallel",),                     # megacore on v7x
            vmem_limit_bytes=vmem_limit,
        ),
        cost_estimate=pl.CostEstimate(
            flops=flops, transcendentals=0, bytes_accessed=bytes_accessed),
    )(x, w1, b1, w2, b2, w3, b3)

    # Strip batch padding outside the kernel (no lane padding to strip).
    return out[:batch]


def init_params(key, state_dim, action_dim, hidden_dim=128):
    """PyTorch-Linear-style uniform fan-in init.

    Weights stored transposed: (in_features, out_features)."""
    ks = jax.random.split(key, 6)

    def linear(kw, kb, fan_in, fan_out):
        bound = 1.0 / (fan_in ** 0.5)
        w = jax.random.uniform(kw, (fan_in, fan_out), jnp.float32, -bound, bound)
        b = jax.random.uniform(kb, (fan_out,), jnp.float32, -bound, bound)
        return w, b

    w1, b1 = linear(ks[0], ks[1], state_dim, hidden_dim)
    w2, b2 = linear(ks[2], ks[3], hidden_dim, hidden_dim)
    w3, b3 = linear(ks[4], ks[5], hidden_dim, action_dim)
    return (w1, b1, w2, b2, w3, b3)


if __name__ == "__main__":
    key = jax.random.PRNGKey(0)
    k_x, k_p = jax.random.split(key)

    batch = 8
    state_dim = 4      # e.g. CartPole-style observation
    action_dim = 2
    hidden_dim = 128   # module default (full 128-lane utilization)

    x = jax.random.normal(k_x, (batch, state_dim), dtype=jnp.float32)
    params = init_params(k_p, state_dim, action_dim, hidden_dim)
    ref = _jnp_forward(x, params)

    # Kernel path at a small batch (force past the fast-path threshold).
    out = network_forward(x, params, min_kernel_batch=0)
    jax.block_until_ready(out)
    assert out.shape == (batch, action_dim)
    assert jnp.allclose(out, ref, atol=1e-5, rtol=1e-5)

    # Default call at this size takes the jnp fast path; same result.
    out_fp = network_forward(x, params)
    jax.block_until_ready(out_fp)
    assert jnp.allclose(out_fp, ref, atol=1e-6, rtol=1e-6)

    # Larger batch with a small tile cap: exercises the multi-tile grid, the
    # even-grid-step selection, and batch padding (1040 -> 4 tiles of 264).
    big_batch = 1040
    xb = jax.random.normal(jax.random.PRNGKey(1), (big_batch, state_dim), jnp.float32)
    ref_b = _jnp_forward(xb, params)

    out_b = network_forward(xb, params, batch_tile=512)
    jax.block_until_ready(out_b)
    assert out_b.shape == (big_batch, action_dim)
    assert jnp.allclose(out_b, ref_b, atol=1e-4, rtol=1e-4)

    # Default (2048-row) tiling: single tile at this size.
    out_d = network_forward(xb, params)
    jax.block_until_ready(out_d)
    assert out_d.shape == (big_batch, action_dim)
    assert jnp.allclose(out_d, ref_b, atol=1e-4, rtol=1e-4)

    print("KERNEL_OK")
</pallas_src>

<mosaic_0001>
module attributes {stable_mosaic.version = 11 : i64} {
  func.func @mlp_kernel(%arg0: i32, %arg1: memref<8x4xf32, #tpu.memory_space<vmem>>, %arg2: memref<4x128xf32, #tpu.memory_space<vmem>>, %arg3: memref<1x128xf32, #tpu.memory_space<vmem>>, %arg4: memref<128x128xf32, #tpu.memory_space<vmem>>, %arg5: memref<1x128xf32, #tpu.memory_space<vmem>>, %arg6: memref<128x2xf32, #tpu.memory_space<vmem>>, %arg7: memref<1x2xf32, #tpu.memory_space<vmem>>, %arg8: memref<8x2xf32, #tpu.memory_space<vmem>>) attributes {dimension_semantics = [#tpu.dimension_semantics<parallel>], iteration_bounds = array<i64: 1>, scalar_prefetch = 0 : i64, scratch_operands = 0 : i64, tpu.core_type = #tpu.core_type<tc>, window_params = [{transform_indices = @transform_0, window_bounds = array<i64: 8, 4>}, {pipeline_mode = #tpu.pipeline_mode<synchronous>, transform_indices = @transform_1, window_bounds = array<i64: 4, 128>}, {pipeline_mode = #tpu.pipeline_mode<synchronous>, transform_indices = @transform_2, window_bounds = array<i64: 1, 128>}, {pipeline_mode = #tpu.pipeline_mode<synchronous>, transform_indices = @transform_3, window_bounds = array<i64: 128, 128>}, {pipeline_mode = #tpu.pipeline_mode<synchronous>, transform_indices = @transform_4, window_bounds = array<i64: 1, 128>}, {pipeline_mode = #tpu.pipeline_mode<synchronous>, transform_indices = @transform_5, window_bounds = array<i64: 128, 2>}, {pipeline_mode = #tpu.pipeline_mode<synchronous>, transform_indices = @transform_6, window_bounds = array<i64: 1, 2>}, {transform_indices = @transform_7, window_bounds = array<i64: 8, 2>}]} {
    %c0 = arith.constant 0 : index
    %c0_0 = arith.constant 0 : index
    %0 = vector.load %arg1[%c0, %c0_0] : memref<8x4xf32, #tpu.memory_space<vmem>>, vector<8x4xf32>
    %c0_1 = arith.constant 0 : index
    %c0_2 = arith.constant 0 : index
    %1 = vector.load %arg2[%c0_1, %c0_2] : memref<4x128xf32, #tpu.memory_space<vmem>>, vector<4x128xf32>
    %cst = arith.constant dense<0.000000e+00> : vector<8x128xf32>
    %2 = tpu.matmul %0, %1, %cst {dimension_numbers = #tpu.dot_dimension_numbers<[1], [0], [0], [1], [0, 0, 1, 1], [], []>} : vector<8x4xf32>, vector<4x128xf32>, vector<8x128xf32> -> vector<8x128xf32>
    %c0_3 = arith.constant 0 : index
    %c0_4 = arith.constant 0 : index
    %3 = vector.load %arg3[%c0_3, %c0_4] : memref<1x128xf32, #tpu.memory_space<vmem>>, vector<1x128xf32>
    %4 = vector.broadcast %3 : vector<1x128xf32> to vector<8x128xf32>
    %5 = arith.addf %2, %4 : vector<8x128xf32>
    %cst_5 = arith.constant 0.000000e+00 : f32
    %6 = vector.broadcast %cst_5 : f32 to vector<8x128xf32>
    %7 = arith.maximumf %5, %6 : vector<8x128xf32>
    %c0_6 = arith.constant 0 : index
    %c0_7 = arith.constant 0 : index
    %8 = vector.load %arg4[%c0_6, %c0_7] : memref<128x128xf32, #tpu.memory_space<vmem>>, vector<128x128xf32>
    %cst_8 = arith.constant dense<0.000000e+00> : vector<8x128xf32>
    %9 = tpu.matmul %7, %8, %cst_8 {dimension_numbers = #tpu.dot_dimension_numbers<[1], [0], [0], [1], [0, 0, 1, 1], [], []>} : vector<8x128xf32>, vector<128x128xf32>, vector<8x128xf32> -> vector<8x128xf32>
    %c0_9 = arith.constant 0 : index
    %c0_10 = arith.constant 0 : index
    %10 = vector.load %arg5[%c0_9, %c0_10] : memref<1x128xf32, #tpu.memory_space<vmem>>, vector<1x128xf32>
    %11 = vector.broadcast %10 : vector<1x128xf32> to vector<8x128xf32>
    %12 = arith.addf %9, %11 : vector<8x128xf32>
    %cst_11 = arith.constant 0.000000e+00 : f32
    %13 = vector.broadcast %cst_11 : f32 to vector<8x128xf32>
    %14 = arith.maximumf %12, %13 : vector<8x128xf32>
    %c0_12 = arith.constant 0 : index
    %c0_13 = arith.constant 0 : index
    %15 = vector.load %arg6[%c0_12, %c0_13] : memref<128x2xf32, #tpu.memory_space<vmem>>, vector<128x2xf32>
    %cst_14 = arith.constant dense<0.000000e+00> : vector<8x2xf32>
    %16 = tpu.matmul %14, %15, %cst_14 {dimension_numbers = #tpu.dot_dimension_numbers<[1], [0], [0], [1], [0, 0, 1, 1], [], []>} : vector<8x128xf32>, vector<128x2xf32>, vector<8x2xf32> -> vector<8x2xf32>
    %c0_15 = arith.constant 0 : index
    %c0_16 = arith.constant 0 : index
    %17 = vector.load %arg7[%c0_15, %c0_16] : memref<1x2xf32, #tpu.memory_space<vmem>>, vector<1x2xf32>
    %18 = vector.broadcast %17 : vector<1x2xf32> to vector<8x2xf32>
    %19 = arith.addf %16, %18 : vector<8x2xf32>
    %c0_17 = arith.constant 0 : index
    %c0_18 = arith.constant 0 : index
    %20 = vector.load %arg8[%c0_17, %c0_18] : memref<8x2xf32, #tpu.memory_space<vmem>>, vector<8x2xf32>
    tpu.vector_store %arg8[%c0_17, %c0_18], %19 {strides = array<i32>} : memref<8x2xf32, #tpu.memory_space<vmem>>, vector<8x2xf32>,
    return
  }
  func.func @transform_0(%arg0: i32) -> (i32, i32) {
    %c0_i32 = arith.constant 0 : i32
    %c0_i32_0 = arith.constant 0 : i32
    return %arg0, %c0_i32 : i32, i32
  }
  func.func @transform_1(%arg0: i32) -> (i32, i32) {
    %c0_i32 = arith.constant 0 : i32
    %c0_i32_0 = arith.constant 0 : i32
    %c0_i32_1 = arith.constant 0 : i32
    return %c0_i32, %c0_i32_0 : i32, i32
  }
  func.func @transform_2(%arg0: i32) -> (i32, i32) {
    %c0_i32 = arith.constant 0 : i32
    %c0_i32_0 = arith.constant 0 : i32
    %c0_i32_1 = arith.constant 0 : i32
    return %c0_i32, %c0_i32_0 : i32, i32
  }
  func.func @transform_3(%arg0: i32) -> (i32, i32) {
    %c0_i32 = arith.constant 0 : i32
    %c0_i32_0 = arith.constant 0 : i32
    %c0_i32_1 = arith.constant 0 : i32
    return %c0_i32, %c0_i32_0 : i32, i32
  }
  func.func @transform_4(%arg0: i32) -> (i32, i32) {
    %c0_i32 = arith.constant 0 : i32
    %c0_i32_0 = arith.constant 0 : i32
    %c0_i32_1 = arith.constant 0 : i32
    return %c0_i32, %c0_i32_0 : i32, i32
  }
  func.func @transform_5(%arg0: i32) -> (i32, i32) {
    %c0_i32 = arith.constant 0 : i32
    %c0_i32_0 = arith.constant 0 : i32
    %c0_i32_1 = arith.constant 0 : i32
    return %c0_i32, %c0_i32_0 : i32, i32
  }
  func.func @transform_6(%arg0: i32) -> (i32, i32) {
    %c0_i32 = arith.constant 0 : i32
    %c0_i32_0 = arith.constant 0 : i32
    %c0_i32_1 = arith.constant 0 : i32
    return %c0_i32, %c0_i32_0 : i32, i32
  }
  func.func @transform_7(%arg0: i32) -> (i32, i32) {
    %c0_i32 = arith.constant 0 : i32
    %c0_i32_0 = arith.constant 0 : i32
    return %arg0, %c0_i32 : i32, i32
  }
}

</mosaic_0001>

<llo_original>
// kernel: tpu_custom_call.1
$region0: #{tpu_custom_call.1}
  #allocation0 [shape = 'u32[]', space=smem, size = 0x4, offset = 0x4, fixed_abs, tag = 'smem constant byte address 0x4 - core index']
  #allocation1 [shape = 'u32[72,128]{1,0:T(1,128)}', space=vmem, size = 0x9000, scoped, tag = 'internal scratch']
  %s0 = inlined_call_operand.vmem [shape: f32[8,4], index: 0, kind: input, shape index: {}]
  %s1 = inlined_call_operand.vmem [shape: f32[4,128], index: 1, kind: input, shape index: {}]
  %s2 = inlined_call_operand.vmem [shape: f32[1,128], index: 2, kind: input, shape index: {}]
  %s3 = inlined_call_operand.vmem [shape: f32[128,128], index: 3, kind: input, shape index: {}]
  %s4 = inlined_call_operand.vmem [shape: f32[1,128], index: 4, kind: input, shape index: {}]
  %s5 = inlined_call_operand.vmem [shape: f32[128,2], index: 5, kind: input, shape index: {}]
  %s6 = inlined_call_operand.vmem [shape: f32[1,2], index: 6, kind: input, shape index: {}]
  %s7 = inlined_call_operand.vmem [shape: f32[8,2], index: 7, kind: output, shape index: {}]
  %s8 = sld [smem:[#allocation0]]
  $region38: #{tpu_custom_call.1} parent=0
    _
  %s10 = ssub.s32 1, %s8
  %s11 = scalar_select 0, %s10, %s8
  // Predicated region
  $region2: #{tpu_custom_call.1} parent=0 // pred_check
    _
  $region3: #{tpu_custom_call.1} parent=0 // pred_check_branch
    %13 = sbr.rel (0) target = $region5
  $region4: #{tpu_custom_call.1} parent=0 // pred_region
    _
  $region5: #{tpu_custom_call.1} parent=0 // pred_fallthru
    _
  // Predicated region
  $region6: #{tpu_custom_call.1} parent=0 // pred_check
    _
  $region7: #{tpu_custom_call.1} parent=0 // pred_check_branch
    %15 = sbr.rel (0) target = $region9
  $region8: #{tpu_custom_call.1} parent=0 // pred_region
    _
  $region9: #{tpu_custom_call.1} parent=0 // pred_fallthru
    _
  // Predicated region
  $region10: #{tpu_custom_call.1} parent=0 // pred_check
    _
  $region11: #{tpu_custom_call.1} parent=0 // pred_check_branch
    %17 = sbr.rel (0) target = $region13
  $region12: #{tpu_custom_call.1} parent=0 // pred_region
    _
  $region13: #{tpu_custom_call.1} parent=0 // pred_fallthru
    _
  // Predicated region
  $region14: #{tpu_custom_call.1} parent=0 // pred_check
    _
  $region15: #{tpu_custom_call.1} parent=0 // pred_check_branch
    %19 = sbr.rel (0) target = $region17
  $region16: #{tpu_custom_call.1} parent=0 // pred_region
    _
  $region17: #{tpu_custom_call.1} parent=0 // pred_fallthru
    _
  // Predicated region
  $region18: #{tpu_custom_call.1} parent=0 // pred_check
    _
  $region19: #{tpu_custom_call.1} parent=0 // pred_check_branch
    %21 = sbr.rel (0) target = $region21
  $region20: #{tpu_custom_call.1} parent=0 // pred_region
    _
  $region21: #{tpu_custom_call.1} parent=0 // pred_fallthru
    _
  // Predicated region
  $region22: #{tpu_custom_call.1} parent=0 // pred_check
    _
  $region23: #{tpu_custom_call.1} parent=0 // pred_check_branch
    %23 = sbr.rel (0) target = $region25
  $region24: #{tpu_custom_call.1} parent=0 // pred_region
    _
  $region25: #{tpu_custom_call.1} parent=0 // pred_fallthru
    _
  // Predicated region
  $region26: #{tpu_custom_call.1} parent=0 // pred_check
    _
  $region27: #{tpu_custom_call.1} parent=0 // pred_check_branch
    %25 = sbr.rel (0) target = $region29
  $region28: #{tpu_custom_call.1} parent=0 // pred_region
    _
  $region29: #{tpu_custom_call.1} parent=0 // pred_fallthru
    _
  %v26 = vld [vmem:[%s0] sm:$0xff]
  %v27 = vld [vmem:[%s1] sm:$0xf]
  %v28 = vld [vmem:[%s2] sm:$0x1]
  %v30 = vperm.slane %v28, 0
  %vm32 = vcmask 31744
  %v34 = vsel %vm32, %v26, 0
  %vm36 = vcmask 1043456
  %v38 = vsel %vm36, %v27, 0
  %40 = vmatpush.msra.mxu0 0.0
  %41 = vmatpush.msra.mxu0 0.0
  %42 = vmatpush.msra.mxu0 0.0
  %43 = vmatpush.msra.mxu0 0.0
  %44 = vmatpush.msra.mxu0 0.0
  %45 = vmatpush.msra.mxu0 0.0
  %46 = vmatpush.msra.mxu0 0.0
  %47 = vmatpush.msra.mxu0 0.0
  %48 = vmatpush.msra.mxu0 0.0
  %49 = vmatpush.msra.mxu0 0.0
  %50 = vmatpush.msra.mxu0 0.0
  %51 = vmatpush.msra.mxu0 0.0
  %52 = vmatpush.msra.mxu0 0.0
  %53 = vmatpush.msra.mxu0 0.0
  %54 = vmatpush.msra.mxu0 0.0
  %55 = vmatpush.msra.mxu0 %v38
  %56 = vmatmul.f32.gmra.mxu0 %v34
  %v57 = vpop.f32.mrf.mxu0
  %v58 = vadd.f32 %v30, %v57
  %59 = vdwg.mxu0
  %v60 = vmax.f32 %v58, 0.0
  %v61 = vld [vmem:[%s3] sm:$0xff]
  %v62 = vld [vmem:[%s3 + $0x8] sm:$0xff]
  %v63 = vld [vmem:[%s3 + $0x10] sm:$0xff]
  %v64 = vld [vmem:[%s3 + $0x18] sm:$0xff]
  %v65 = vld [vmem:[%s3 + $0x20] sm:$0xff]
  %v66 = vld [vmem:[%s3 + $0x28] sm:$0xff]
  %v67 = vld [vmem:[%s3 + $0x30] sm:$0xff]
  %v68 = vld [vmem:[%s3 + $0x38] sm:$0xff]
  %v69 = vld [vmem:[%s3 + $0x40] sm:$0xff]
  %v70 = vld [vmem:[%s3 + $0x48] sm:$0xff]
  %v71 = vld [vmem:[%s3 + $0x50] sm:$0xff]
  %v72 = vld [vmem:[%s3 + $0x58] sm:$0xff]
  %v73 = vld [vmem:[%s3 + $0x60] sm:$0xff]
  %v74 = vld [vmem:[%s3 + $0x68] sm:$0xff]
  %v75 = vld [vmem:[%s3 + $0x70] sm:$0xff]
  %v76 = vld [vmem:[%s3 + $0x78] sm:$0xff]
  %v77 = vld [vmem:[%s4] sm:$0x1]
  %v79 = vperm.slane %v77, 0
  %81 = vmatpush.msra.mxu0 %v76
  %82 = vmatpush.msra.mxu0 %v75
  %83 = vmatpush.msra.mxu0 %v74
  %84 = vmatpush.msra.mxu0 %v73
  %85 = vmatpush.msra.mxu0 %v72
  %86 = vmatpush.msra.mxu0 %v71
  %87 = vmatpush.msra.mxu0 %v70
  %88 = vmatpush.msra.mxu0 %v69
  %89 = vmatpush.msra.mxu0 %v68
  %90 = vmatpush.msra.mxu0 %v67
  %91 = vmatpush.msra.mxu0 %v66
  %92 = vmatpush.msra.mxu0 %v65
  %93 = vmatpush.msra.mxu0 %v64
  %94 = vmatpush.msra.mxu0 %v63
  %95 = vmatpush.msra.mxu0 %v62
  %96 = vmatpush.msra.mxu0 %v61
  %97 = vmatmul.f32.gmra.mxu0 %v60
  %v98 = vpop.f32.mrf.mxu0
  %v99 = vadd.f32 %v79, %v98
  %100 = vdwg.mxu0
  %v101 = vmax.f32 %v99, 0.0
  %v102 = vld [vmem:[%s5] sm:$0xff]
  %v103 = vld [vmem:[%s5 + $0x8] sm:$0xff]
  %v104 = vld [vmem:[%s5 + $0x10] sm:$0xff]
  %v105 = vld [vmem:[%s5 + $0x18] sm:$0xff]
  %v106 = vld [vmem:[%s5 + $0x20] sm:$0xff]
  %v107 = vld [vmem:[%s5 + $0x28] sm:$0xff]
  %v108 = vld [vmem:[%s5 + $0x30] sm:$0xff]
  %v109 = vld [vmem:[%s5 + $0x38] sm:$0xff]
  %v110 = vld [vmem:[%s5 + $0x40] sm:$0xff]
  %v111 = vld [vmem:[%s5 + $0x48] sm:$0xff]
  %v112 = vld [vmem:[%s5 + $0x50] sm:$0xff]
  %v113 = vld [vmem:[%s5 + $0x58] sm:$0xff]
  %v114 = vld [vmem:[%s5 + $0x60] sm:$0xff]
  %v115 = vld [vmem:[%s5 + $0x68] sm:$0xff]
  %v116 = vld [vmem:[%s5 + $0x70] sm:$0xff]
  %v117 = vld [vmem:[%s5 + $0x78] sm:$0xff]
  %v118 = vld [vmem:[%s6] sm:$0x1]
  %v120 = vperm.slane %v118, 0
  %122 = vmatpush.msra.mxu0 %v117
  %123 = vmatpush.msra.mxu0 %v116
  %124 = vmatpush.msra.mxu0 %v115
  %125 = vmatpush.msra.mxu0 %v114
  %126 = vmatpush.msra.mxu0 %v113
  %127 = vmatpush.msra.mxu0 %v112
  %128 = vmatpush.msra.mxu0 %v111
  %129 = vmatpush.msra.mxu0 %v110
  %130 = vmatpush.msra.mxu0 %v109
  %131 = vmatpush.msra.mxu0 %v108
  %132 = vmatpush.msra.mxu0 %v107
  %133 = vmatpush.msra.mxu0 %v106
  %134 = vmatpush.msra.mxu0 %v105
  %135 = vmatpush.msra.mxu0 %v104
  %136 = vmatpush.msra.mxu0 %v103
  %137 = vmatpush.msra.mxu0 %v102
  %138 = vmatmul.f32.gmra.mxu0 %v101
  %v139 = vpop.f32.mrf.mxu0
  %v140 = vadd.f32 %v120, %v139
  %141 = vdwg.mxu0
  %vm142 = vcmask 15360
  %143 = vst.msk [vmem:[%s7] sm:$0xff] %vm142, %v140
  // Predicated region
  $region30: #{tpu_custom_call.1} parent=0 // pred_check
    _
  $region31: #{tpu_custom_call.1} parent=0 // pred_check_branch
    %145 = sbr.rel (0) target = $region33
  $region32: #{tpu_custom_call.1} parent=0 // pred_region
    _
  $region33: #{tpu_custom_call.1} parent=0 // pred_fallthru
    _
  // Predicated region
  $region34: #{tpu_custom_call.1} parent=0 // pred_check
    _
  $region35: #{tpu_custom_call.1} parent=0 // pred_check_branch
    %147 = sbr.rel (0) target = $region37
  $region36: #{tpu_custom_call.1} parent=0 // pred_region
    _
  $region37: #{tpu_custom_call.1} parent=0 // pred_fallthru
    _

</llo_original>
